<compile_context>
chip_gen: v7x
topology: tpu7x:2x2x1
jax: 0.10.0
libtpu: 0.0.40
codegen_flags: <defaults>
</compile_context>

<pallas_src>
import functools
import math

import jax
import jax.numpy as jnp
from jax.experimental import pallas as pl
from jax.experimental.pallas import tpu as pltpu

_LANE = 128
_SUBLANE = 8
_SEG_WEIGHT_BUDGET = 24 << 20   # resident padded weight+bias bytes per fused call
_VMEM_CAP = 64 << 20            # portable scoped-VMEM cap (v7x physical = 64 MiB)


def _round_up(x: int, m: int) -> int:
    return ((x + m - 1) // m) * m


# ---------------------------------------------------------------------------
# Fused kernel for a contiguous segment of layers.
# refs = (x_ref, w0, b0, w1, b1, ..., o_ref)
#   * weights are (din_pad, dout_pad) (pre-transposed, zero-padded, f32 or bf16)
#   * biases are (1, dout_pad) f32
#   * activations stay in vregs between layers; padded lanes stay exactly zero
#     (zero weight rows/cols, zero bias, LeakyReLU(0)==0).
# ---------------------------------------------------------------------------
def _mlp_segment_kernel(*refs, n_layers, negative_slope, leading_act):
    x_ref = refs[0]
    wb = refs[1:1 + 2 * n_layers]
    o_ref = refs[1 + 2 * n_layers]

    h = x_ref[...]                                           # (tb, din_pad) f32
    for li in range(n_layers):
        if li > 0 or leading_act:
            # LeakyReLU (PyTorch default negative_slope=0.01), f32 elementwise
            h = jnp.where(h >= 0, h, h * negative_slope)
        w = wb[2 * li][...]                                  # (din_pad, dout_pad)
        b = wb[2 * li + 1][...]                              # (1, dout_pad) f32
        h = jnp.dot(h.astype(w.dtype), w,
                    preferred_element_type=jnp.float32) + b  # f32 accumulate
    o_ref[...] = h.astype(o_ref.dtype)


# ---------------------------------------------------------------------------
# Parameter handling
# ---------------------------------------------------------------------------
def init_network_params(key, input_dim: int, output_dim: int,
                        hidden_dims: list[int]):
    """PyTorch-layout params (W: (out, in), b: (out,)), nn.Linear default init."""
    dims = [input_dim, *hidden_dims, output_dim]
    params = []
    for i in range(1, len(dims)):
        fan_in, fan_out = dims[i - 1], dims[i]
        key, wk, bk = jax.random.split(key, 3)
        bound = 1.0 / math.sqrt(fan_in)
        w = jax.random.uniform(wk, (fan_out, fan_in), jnp.float32,
                               minval=-bound, maxval=bound)
        b = jax.random.uniform(bk, (fan_out,), jnp.float32,
                               minval=-bound, maxval=bound)
        params.append((w, b))
    return params


def prepare_padded_params(params, weight_dtype=jnp.float32):
    """One-time: transpose to (Din, Dout), zero-pad every feature dim to 128,
    and optionally store weights as bf16 (biases stay f32)."""
    dims = [params[0][0].shape[1]] + [w.shape[0] for w, _ in params]
    dims_pad = tuple(_round_up(d, _LANE) for d in dims)
    padded = []
    for i, (w, b) in enumerate(params):
        din, dout = dims[i], dims[i + 1]
        din_p, dout_p = dims_pad[i], dims_pad[i + 1]
        w_t = jnp.zeros((din_p, dout_p), jnp.float32).at[:din, :dout].set(w.T)
        b_p = jnp.zeros((1, dout_p), jnp.float32).at[:, :dout].set(b)
        padded.append((w_t.astype(weight_dtype), b_p))
    return padded, dims_pad


# ---------------------------------------------------------------------------
# One fused pallas_call for a segment of layers
# ---------------------------------------------------------------------------
def _run_segment(x_pad, seg_params, *, leading_act, negative_slope, tb,
                 single_buffer_weights):
    pb, din_pad = x_pad.shape
    dout_pad = seg_params[-1][0].shape[1]
    nb = pb // tb
    n_layers = len(seg_params)

    # Constant-index weight/bias blocks: single-buffered (no point in a 2nd
    # pipeline buffer for data that never changes across the grid).
    w_kw = {"pipeline_mode": pl.Buffered(1)} if single_buffer_weights else {}

    in_specs = [pl.BlockSpec((tb, din_pad), lambda i: (i, 0))]
    flat_inputs = [x_pad]
    for w, b in seg_params:
        in_specs.append(pl.BlockSpec(w.shape, lambda i: (0, 0), **w_kw))
        in_specs.append(pl.BlockSpec(b.shape, lambda i: (0, 0), **w_kw))
        flat_inputs.extend((w, b))

    # Explicit VMEM budget: resident weights (+double-buffer factor if not
    # single-buffered) + double-buffered x/out tiles, 1.5x headroom.
    wb_bytes = sum(int(w.size) * w.dtype.itemsize + int(b.size) * b.dtype.itemsize
                   for w, b in seg_params)
    wb_factor = 1 if single_buffer_weights else 2
    io_bytes = 2 * tb * (din_pad + dout_pad) * 4
    vmem_limit = min(max(int((wb_bytes * wb_factor + io_bytes) * 1.5), 32 << 20),
                     _VMEM_CAP)

    kernel = functools.partial(_mlp_segment_kernel, n_layers=n_layers,
                               negative_slope=negative_slope,
                               leading_act=leading_act)

    return pl.pallas_call(
        kernel,
        out_shape=jax.ShapeDtypeStruct((pb, dout_pad), jnp.float32),
        grid=(nb,),
        in_specs=in_specs,
        out_specs=pl.BlockSpec((tb, dout_pad), lambda i: (i, 0)),
        compiler_params=pltpu.CompilerParams(
            dimension_semantics=("parallel",),
            vmem_limit_bytes=vmem_limit),
    )(*flat_inputs)


def _run_segment_safe(x_pad, seg_params, **kw):
    try:
        return _run_segment(x_pad, seg_params, single_buffer_weights=True, **kw)
    except Exception:
        # Fallback for jax builds without pipeline_mode=pl.Buffered support.
        return _run_segment(x_pad, seg_params, single_buffer_weights=False, **kw)


# ---------------------------------------------------------------------------
# Forward pass
# ---------------------------------------------------------------------------
def network_forward(padded_params, dims_pad, x: jax.Array, output_dim: int,
                    negative_slope: float = 0.01) -> jax.Array:
    batch, in_dim = x.shape
    din_pad0, dout_pad_last = dims_pad[0], dims_pad[-1]

    # Batch tile: multiple of 8 sublanes, capped at 256 rows (fills the
    # 256-wide MXU M dim on v6e/v7x); aim for >=2 grid steps when batch allows
    # so the "parallel" axis feeds both v7x TensorCores.
    if batch <= _SUBLANE:
        tb = _SUBLANE
    else:
        tb = min(256, _round_up(pl.cdiv(batch, 2), _SUBLANE))
    pb = _round_up(batch, tb)

    # Pad only when needed (single jnp.pad; no full zeroed copy).
    h = x.astype(jnp.float32)
    if in_dim != din_pad0 or pb != batch:
        h = jnp.pad(h, ((0, pb - batch), (0, din_pad0 - in_dim)))

    # Split layers into segments whose resident weights fit the VMEM budget
    # (keeps the fused all-resident design viable on v7x's 64 MiB VMEM).
    segments, cur, cur_bytes = [], [], 0
    for wbt in padded_params:
        w, b = wbt
        nbytes = int(w.size) * w.dtype.itemsize + int(b.size) * b.dtype.itemsize
        if cur and cur_bytes + nbytes > _SEG_WEIGHT_BUDGET:
            segments.append(cur)
            cur, cur_bytes = [], 0
        cur.append(wbt)
        cur_bytes += nbytes
    segments.append(cur)
    # TODO(synk): a single layer whose padded weights exceed the budget would
    # need dout-tiling with an accumulator grid axis; not implemented here.

    first = True
    for seg in segments:
        h = _run_segment_safe(h, seg, leading_act=not first,
                              negative_slope=negative_slope, tb=tb)
        first = False

    if pb == batch and dout_pad_last == output_dim:
        return h
    return h[:batch, :output_dim]


# Pure-JAX reference for sanity checking (matches the PyTorch module)
def network_ref(params, x):
    w, b = params[0]
    h = x @ w.T + b
    for w, b in params[1:]:
        h = jnp.where(h >= 0, h, 0.01 * h)
        h = h @ w.T + b
    return h


if __name__ == "__main__":
    key = jax.random.PRNGKey(0)
    input_dim, output_dim = 32, 16
    hidden_dims = [64, 64]

    pkey, xkey1, xkey2 = jax.random.split(key, 3)
    params = init_network_params(pkey, input_dim, output_dim, hidden_dims)

    # --- f32-weight path, tiny batch (single grid step) -------------------
    pp32, dims_pad = prepare_padded_params(params, jnp.float32)
    x1 = jax.random.normal(xkey1, (8, input_dim), jnp.float32)
    out1 = jax.block_until_ready(network_forward(pp32, dims_pad, x1, output_dim))
    ref1 = network_ref(params, x1)
    assert out1.shape == (8, output_dim)
    assert jnp.allclose(out1, ref1, atol=1e-5, rtol=1e-5)

    # --- f32 path, batch that needs padding and >=2 grid steps ------------
    x2 = jax.random.normal(xkey2, (20, input_dim), jnp.float32)
    out2 = jax.block_until_ready(network_forward(pp32, dims_pad, x2, output_dim))
    ref2 = network_ref(params, x2)
    assert out2.shape == (20, output_dim)
    assert jnp.allclose(out2, ref2, atol=1e-5, rtol=1e-5)

    # --- bf16-weight / f32-accumulate path (halved weight VMEM/DMA) -------
    ppbf, _ = prepare_padded_params(params, jnp.bfloat16)
    out3 = jax.block_until_ready(network_forward(ppbf, dims_pad, x1, output_dim))
    assert out3.shape == (8, output_dim)
    assert jnp.allclose(out3, ref1, atol=5e-2, rtol=5e-2)

    print("KERNEL_OK")
</pallas_src>

<mosaic_0001>
module attributes {stable_mosaic.version = 11 : i64} {
  func.func @_mlp_segment_kernel(%arg0: i32, %arg1: memref<8x128xf32, #tpu.memory_space<vmem>>, %arg2: memref<128x128xf32, #tpu.memory_space<vmem>>, %arg3: memref<1x128xf32, #tpu.memory_space<vmem>>, %arg4: memref<128x128xf32, #tpu.memory_space<vmem>>, %arg5: memref<1x128xf32, #tpu.memory_space<vmem>>, %arg6: memref<128x128xf32, #tpu.memory_space<vmem>>, %arg7: memref<1x128xf32, #tpu.memory_space<vmem>>, %arg8: memref<8x128xf32, #tpu.memory_space<vmem>>) attributes {dimension_semantics = [#tpu.dimension_semantics<parallel>], iteration_bounds = array<i64: 1>, scalar_prefetch = 0 : i64, scratch_operands = 0 : i64, tpu.core_type = #tpu.core_type<tc>, window_params = [{transform_indices = @transform_0, window_bounds = array<i64: 8, 128>}, {pipeline_mode = #tpu.pipeline_mode<synchronous>, transform_indices = @transform_1, window_bounds = array<i64: 128, 128>}, {pipeline_mode = #tpu.pipeline_mode<synchronous>, transform_indices = @transform_2, window_bounds = array<i64: 1, 128>}, {pipeline_mode = #tpu.pipeline_mode<synchronous>, transform_indices = @transform_3, window_bounds = array<i64: 128, 128>}, {pipeline_mode = #tpu.pipeline_mode<synchronous>, transform_indices = @transform_4, window_bounds = array<i64: 1, 128>}, {pipeline_mode = #tpu.pipeline_mode<synchronous>, transform_indices = @transform_5, window_bounds = array<i64: 128, 128>}, {pipeline_mode = #tpu.pipeline_mode<synchronous>, transform_indices = @transform_6, window_bounds = array<i64: 1, 128>}, {transform_indices = @transform_7, window_bounds = array<i64: 8, 128>}]} {
    %c0 = arith.constant 0 : index
    %c0_0 = arith.constant 0 : index
    %0 = vector.load %arg1[%c0, %c0_0] : memref<8x128xf32, #tpu.memory_space<vmem>>, vector<8x128xf32>
    %c0_1 = arith.constant 0 : index
    %c0_2 = arith.constant 0 : index
    %1 = vector.load %arg2[%c0_1, %c0_2] : memref<128x128xf32, #tpu.memory_space<vmem>>, vector<128x128xf32>
    %c0_3 = arith.constant 0 : index
    %c0_4 = arith.constant 0 : index
    %2 = vector.load %arg3[%c0_3, %c0_4] : memref<1x128xf32, #tpu.memory_space<vmem>>, vector<1x128xf32>
    %cst = arith.constant dense<0.000000e+00> : vector<8x128xf32>
    %3 = tpu.matmul %0, %1, %cst {dimension_numbers = #tpu.dot_dimension_numbers<[1], [0], [0], [1], [0, 0, 1, 1], [], []>} : vector<8x128xf32>, vector<128x128xf32>, vector<8x128xf32> -> vector<8x128xf32>
    %4 = vector.broadcast %2 : vector<1x128xf32> to vector<8x128xf32>
    %5 = arith.addf %3, %4 : vector<8x128xf32>
    %cst_5 = arith.constant 0.000000e+00 : f32
    %6 = vector.broadcast %cst_5 : f32 to vector<8x128xf32>
    %7 = arith.cmpf oge, %5, %6 : vector<8x128xf32>
    %cst_6 = arith.constant 0.00999999977 : f32
    %8 = vector.broadcast %cst_6 : f32 to vector<8x128xf32>
    %9 = arith.mulf %5, %8 : vector<8x128xf32>
    %10 = arith.select %7, %5, %9 : vector<8x128xi1>, vector<8x128xf32>
    %c0_7 = arith.constant 0 : index
    %c0_8 = arith.constant 0 : index
    %11 = vector.load %arg4[%c0_7, %c0_8] : memref<128x128xf32, #tpu.memory_space<vmem>>, vector<128x128xf32>
    %c0_9 = arith.constant 0 : index
    %c0_10 = arith.constant 0 : index
    %12 = vector.load %arg5[%c0_9, %c0_10] : memref<1x128xf32, #tpu.memory_space<vmem>>, vector<1x128xf32>
    %cst_11 = arith.constant dense<0.000000e+00> : vector<8x128xf32>
    %13 = tpu.matmul %10, %11, %cst_11 {dimension_numbers = #tpu.dot_dimension_numbers<[1], [0], [0], [1], [0, 0, 1, 1], [], []>} : vector<8x128xf32>, vector<128x128xf32>, vector<8x128xf32> -> vector<8x128xf32>
    %14 = vector.broadcast %12 : vector<1x128xf32> to vector<8x128xf32>
    %15 = arith.addf %13, %14 : vector<8x128xf32>
    %cst_12 = arith.constant 0.000000e+00 : f32
    %16 = vector.broadcast %cst_12 : f32 to vector<8x128xf32>
    %17 = arith.cmpf oge, %15, %16 : vector<8x128xf32>
    %cst_13 = arith.constant 0.00999999977 : f32
    %18 = vector.broadcast %cst_13 : f32 to vector<8x128xf32>
    %19 = arith.mulf %15, %18 : vector<8x128xf32>
    %20 = arith.select %17, %15, %19 : vector<8x128xi1>, vector<8x128xf32>
    %c0_14 = arith.constant 0 : index
    %c0_15 = arith.constant 0 : index
    %21 = vector.load %arg6[%c0_14, %c0_15] : memref<128x128xf32, #tpu.memory_space<vmem>>, vector<128x128xf32>
    %c0_16 = arith.constant 0 : index
    %c0_17 = arith.constant 0 : index
    %22 = vector.load %arg7[%c0_16, %c0_17] : memref<1x128xf32, #tpu.memory_space<vmem>>, vector<1x128xf32>
    %cst_18 = arith.constant dense<0.000000e+00> : vector<8x128xf32>
    %23 = tpu.matmul %20, %21, %cst_18 {dimension_numbers = #tpu.dot_dimension_numbers<[1], [0], [0], [1], [0, 0, 1, 1], [], []>} : vector<8x128xf32>, vector<128x128xf32>, vector<8x128xf32> -> vector<8x128xf32>
    %24 = vector.broadcast %22 : vector<1x128xf32> to vector<8x128xf32>
    %25 = arith.addf %23, %24 : vector<8x128xf32>
    %c0_19 = arith.constant 0 : index
    %c0_20 = arith.constant 0 : index
    %26 = vector.load %arg8[%c0_19, %c0_20] : memref<8x128xf32, #tpu.memory_space<vmem>>, vector<8x128xf32>
    tpu.vector_store %arg8[%c0_19, %c0_20], %25 {strides = array<i32>} : memref<8x128xf32, #tpu.memory_space<vmem>>, vector<8x128xf32>,
    return
  }
  func.func @transform_0(%arg0: i32) -> (i32, i32) {
    %c0_i32 = arith.constant 0 : i32
    %c0_i32_0 = arith.constant 0 : i32
    return %arg0, %c0_i32 : i32, i32
  }
  func.func @transform_1(%arg0: i32) -> (i32, i32) {
    %c0_i32 = arith.constant 0 : i32
    %c0_i32_0 = arith.constant 0 : i32
    %c0_i32_1 = arith.constant 0 : i32
    return %c0_i32, %c0_i32_0 : i32, i32
  }
  func.func @transform_2(%arg0: i32) -> (i32, i32) {
    %c0_i32 = arith.constant 0 : i32
    %c0_i32_0 = arith.constant 0 : i32
    %c0_i32_1 = arith.constant 0 : i32
    return %c0_i32, %c0_i32_0 : i32, i32
  }
  func.func @transform_3(%arg0: i32) -> (i32, i32) {
    %c0_i32 = arith.constant 0 : i32
    %c0_i32_0 = arith.constant 0 : i32
    %c0_i32_1 = arith.constant 0 : i32
    return %c0_i32, %c0_i32_0 : i32, i32
  }
  func.func @transform_4(%arg0: i32) -> (i32, i32) {
    %c0_i32 = arith.constant 0 : i32
    %c0_i32_0 = arith.constant 0 : i32
    %c0_i32_1 = arith.constant 0 : i32
    return %c0_i32, %c0_i32_0 : i32, i32
  }
  func.func @transform_5(%arg0: i32) -> (i32, i32) {
    %c0_i32 = arith.constant 0 : i32
    %c0_i32_0 = arith.constant 0 : i32
    %c0_i32_1 = arith.constant 0 : i32
    return %c0_i32, %c0_i32_0 : i32, i32
  }
  func.func @transform_6(%arg0: i32) -> (i32, i32) {
    %c0_i32 = arith.constant 0 : i32
    %c0_i32_0 = arith.constant 0 : i32
    %c0_i32_1 = arith.constant 0 : i32
    return %c0_i32, %c0_i32_0 : i32, i32
  }
  func.func @transform_7(%arg0: i32) -> (i32, i32) {
    %c0_i32 = arith.constant 0 : i32
    %c0_i32_0 = arith.constant 0 : i32
    return %arg0, %c0_i32 : i32, i32
  }
}

module attributes {stable_mosaic.version = 11 : i64} {
  func.func @_mlp_segment_kernel(%arg0: i32, %arg1: memref<8x128xf32, #tpu.memory_space<vmem>>, %arg2: memref<128x128xf32, #tpu.memory_space<vmem>>, %arg3: memref<1x128xf32, #tpu.memory_space<vmem>>, %arg4: memref<128x128xf32, #tpu.memory_space<vmem>>, %arg5: memref<1x128xf32, #tpu.memory_space<vmem>>, %arg6: memref<128x128xf32, #tpu.memory_space<vmem>>, %arg7: memref<1x128xf32, #tpu.memory_space<vmem>>, %arg8: memref<8x128xf32, #tpu.memory_space<vmem>>) attributes {dimension_semantics = [#tpu.dimension_semantics<parallel>], iteration_bounds = array<i64: 1>, scalar_prefetch = 0 : i64, scratch_operands = 0 : i64, tpu.core_type = #tpu.core_type<tc>, window_params = [{transform_indices = @transform_0, window_bounds = array<i64: 8, 128>}, {pipeline_mode = #tpu.pipeline_mode<synchronous>, transform_indices = @transform_1, window_bounds = array<i64: 128, 128>}, {pipeline_mode = #tpu.pipeline_mode<synchronous>, transform_indices = @transform_2, window_bounds = array<i64: 1, 128>}, {pipeline_mode = #tpu.pipeline_mode<synchronous>, transform_indices = @transform_3, window_bounds = array<i64: 128, 128>}, {pipeline_mode = #tpu.pipeline_mode<synchronous>, transform_indices = @transform_4, window_bounds = array<i64: 1, 128>}, {pipeline_mode = #tpu.pipeline_mode<synchronous>, transform_indices = @transform_5, window_bounds = array<i64: 128, 128>}, {pipeline_mode = #tpu.pipeline_mode<synchronous>, transform_indices = @transform_6, window_bounds = array<i64: 1, 128>}, {transform_indices = @transform_7, window_bounds = array<i64: 8, 128>}]} {
    %c0 = arith.constant 0 : index
    %c0_0 = arith.constant 0 : index
    %0 = vector.load %arg1[%c0, %c0_0] : memref<8x128xf32, #tpu.memory_space<vmem>>, vector<8x128xf32>
    %c0_1 = arith.constant 0 : index
    %c0_2 = arith.constant 0 : index
    %1 = vector.load %arg2[%c0_1, %c0_2] : memref<128x128xf32, #tpu.memory_space<vmem>>, vector<128x128xf32>
    %c0_3 = arith.constant 0 : index
    %c0_4 = arith.constant 0 : index
    %2 = vector.load %arg3[%c0_3, %c0_4] : memref<1x128xf32, #tpu.memory_space<vmem>>, vector<1x128xf32>
    %cst = arith.constant dense<0.000000e+00> : vector<8x128xf32>
    %3 = tpu.matmul %0, %1, %cst {dimension_numbers = #tpu.dot_dimension_numbers<[1], [0], [0], [1], [0, 0, 1, 1], [], []>} : vector<8x128xf32>, vector<128x128xf32>, vector<8x128xf32> -> vector<8x128xf32>
    %4 = vector.broadcast %2 : vector<1x128xf32> to vector<8x128xf32>
    %5 = arith.addf %3, %4 : vector<8x128xf32>
    %cst_5 = arith.constant 0.000000e+00 : f32
    %6 = vector.broadcast %cst_5 : f32 to vector<8x128xf32>
    %7 = arith.cmpf oge, %5, %6 : vector<8x128xf32>
    %cst_6 = arith.constant 0.00999999977 : f32
    %8 = vector.broadcast %cst_6 : f32 to vector<8x128xf32>
    %9 = arith.mulf %5, %8 : vector<8x128xf32>
    %10 = arith.select %7, %5, %9 : vector<8x128xi1>, vector<8x128xf32>
    %c0_7 = arith.constant 0 : index
    %c0_8 = arith.constant 0 : index
    %11 = vector.load %arg4[%c0_7, %c0_8] : memref<128x128xf32, #tpu.memory_space<vmem>>, vector<128x128xf32>
    %c0_9 = arith.constant 0 : index
    %c0_10 = arith.constant 0 : index
    %12 = vector.load %arg5[%c0_9, %c0_10] : memref<1x128xf32, #tpu.memory_space<vmem>>, vector<1x128xf32>
    %cst_11 = arith.constant dense<0.000000e+00> : vector<8x128xf32>
    %13 = tpu.matmul %10, %11, %cst_11 {dimension_numbers = #tpu.dot_dimension_numbers<[1], [0], [0], [1], [0, 0, 1, 1], [], []>} : vector<8x128xf32>, vector<128x128xf32>, vector<8x128xf32> -> vector<8x128xf32>
    %14 = vector.broadcast %12 : vector<1x128xf32> to vector<8x128xf32>
    %15 = arith.addf %13, %14 : vector<8x128xf32>
    %cst_12 = arith.constant 0.000000e+00 : f32
    %16 = vector.broadcast %cst_12 : f32 to vector<8x128xf32>
    %17 = arith.cmpf oge, %15, %16 : vector<8x128xf32>
    %cst_13 = arith.constant 0.00999999977 : f32
    %18 = vector.broadcast %cst_13 : f32 to vector<8x128xf32>
    %19 = arith.mulf %15, %18 : vector<8x128xf32>
    %20 = arith.select %17, %15, %19 : vector<8x128xi1>, vector<8x128xf32>
    %c0_14 = arith.constant 0 : index
    %c0_15 = arith.constant 0 : index
    %21 = vector.load %arg6[%c0_14, %c0_15] : memref<128x128xf32, #tpu.memory_space<vmem>>, vector<128x128xf32>
    %c0_16 = arith.constant 0 : index
    %c0_17 = arith.constant 0 : index
    %22 = vector.load %arg7[%c0_16, %c0_17] : memref<1x128xf32, #tpu.memory_space<vmem>>, vector<1x128xf32>
    %cst_18 = arith.constant dense<0.000000e+00> : vector<8x128xf32>
    %23 = tpu.matmul %20, %21, %cst_18 {dimension_numbers = #tpu.dot_dimension_numbers<[1], [0], [0], [1], [0, 0, 1, 1], [], []>} : vector<8x128xf32>, vector<128x128xf32>, vector<8x128xf32> -> vector<8x128xf32>
    %24 = vector.broadcast %22 : vector<1x128xf32> to vector<8x128xf32>
    %25 = arith.addf %23, %24 : vector<8x128xf32>
    %c0_19 = arith.constant 0 : index
    %c0_20 = arith.constant 0 : index
    %26 = vector.load %arg8[%c0_19, %c0_20] : memref<8x128xf32, #tpu.memory_space<vmem>>, vector<8x128xf32>
    tpu.vector_store %arg8[%c0_19, %c0_20], %25 {strides = array<i32>} : memref<8x128xf32, #tpu.memory_space<vmem>>, vector<8x128xf32>,
    return
  }
  func.func @transform_0(%arg0: i32) -> (i32, i32) {
    %c0_i32 = arith.constant 0 : i32
    %c0_i32_0 = arith.constant 0 : i32
    return %arg0, %c0_i32 : i32, i32
  }
  func.func @transform_1(%arg0: i32) -> (i32, i32) {
    %c0_i32 = arith.constant 0 : i32
    %c0_i32_0 = arith.constant 0 : i32
    %c0_i32_1 = arith.constant 0 : i32
    return %c0_i32, %c0_i32_0 : i32, i32
  }
  func.func @transform_2(%arg0: i32) -> (i32, i32) {
    %c0_i32 = arith.constant 0 : i32
    %c0_i32_0 = arith.constant 0 : i32
    %c0_i32_1 = arith.constant 0 : i32
    return %c0_i32, %c0_i32_0 : i32, i32
  }
  func.func @transform_3(%arg0: i32) -> (i32, i32) {
    %c0_i32 = arith.constant 0 : i32
    %c0_i32_0 = arith.constant 0 : i32
    %c0_i32_1 = arith.constant 0 : i32
    return %c0_i32, %c0_i32_0 : i32, i32
  }
  func.func @transform_4(%arg0: i32) -> (i32, i32) {
    %c0_i32 = arith.constant 0 : i32
    %c0_i32_0 = arith.constant 0 : i32
    %c0_i32_1 = arith.constant 0 : i32
    return %c0_i32, %c0_i32_0 : i32, i32
  }
  func.func @transform_5(%arg0: i32) -> (i32, i32) {
    %c0_i32 = arith.constant 0 : i32
    %c0_i32_0 = arith.constant 0 : i32
    %c0_i32_1 = arith.constant 0 : i32
    return %c0_i32, %c0_i32_0 : i32, i32
  }
  func.func @transform_6(%arg0: i32) -> (i32, i32) {
    %c0_i32 = arith.constant 0 : i32
    %c0_i32_0 = arith.constant 0 : i32
    %c0_i32_1 = arith.constant 0 : i32
    return %c0_i32, %c0_i32_0 : i32, i32
  }
  func.func @transform_7(%arg0: i32) -> (i32, i32) {
    %c0_i32 = arith.constant 0 : i32
    %c0_i32_0 = arith.constant 0 : i32
    return %arg0, %c0_i32 : i32, i32
  }
}

</mosaic_0001>

<llo_original>
// kernel: tpu_custom_call.1
$region0: #{tpu_custom_call.1}
  #allocation0 [shape = 'u32[]', space=smem, size = 0x4, offset = 0x4, fixed_abs, tag = 'smem constant byte address 0x4 - core index']
  #allocation1 [shape = 'u32[144,128]{1,0:T(1,128)}', space=vmem, size = 0x12000, scoped, tag = 'internal scratch']
  %s0 = inlined_call_operand.hbm [shape: f32[8,128], index: 0, kind: input, shape index: {}]
  %s1 = inlined_call_operand.hbm [shape: f32[128,128], index: 1, kind: input, shape index: {}]
  %s2 = inlined_call_operand.vmem [shape: f32[1,128], index: 2, kind: input, shape index: {}]
  %s3 = inlined_call_operand.hbm [shape: f32[128,128], index: 3, kind: input, shape index: {}]
  %s4 = inlined_call_operand.vmem [shape: f32[1,128], index: 4, kind: input, shape index: {}]
  %s5 = inlined_call_operand.hbm [shape: f32[128,128], index: 5, kind: input, shape index: {}]
  %s6 = inlined_call_operand.vmem [shape: f32[1,128], index: 6, kind: input, shape index: {}]
  %s7 = inlined_call_operand.hbm [shape: f32[8,128], index: 7, kind: output, shape index: {}]
  %s8 = sld [smem:[#allocation0]]
  $region54: #{tpu_custom_call.1} parent=0
    _
  %s10 = ssub.s32 1, %s8
  %s11 = scalar_select 0, %s10, %s8
  $region1: #{tpu_custom_call.1} parent=0
    #allocation2 [shape = 'u8[4096]{0}', space=vmem, size = 0x1000, scoped, tag = 'input window, operand 0, single buffered']
    #allocation3 [shape = 's32[1]{0}', space=sflag, size = 0x4, scoped, tag = 'scoped memory for tpu_custom_call.1']
    #allocation4 [shape = 's32[1]{0}', space=sflag, size = 0x4, scoped, tag = 'scoped memory for tpu_custom_call.1']
    #allocation5 [shape = 'u8[65536]{0}', space=vmem, size = 0x10000, scoped, tag = 'input window, operand 1, single buffered']
    #allocation6 [shape = 's32[1]{0}', space=sflag, size = 0x4, scoped, tag = 'scoped memory for tpu_custom_call.1']
    #allocation7 [shape = 'u8[65536]{0}', space=vmem, size = 0x10000, scoped, tag = 'input window, operand 3, single buffered']
    #allocation8 [shape = 'u8[65536]{0}', space=vmem, size = 0x10000, scoped, tag = 'input window, operand 5, single buffered']
    #allocation9 [shape = 's32[1]{0}', space=sflag, size = 0x4, scoped, tag = 'scoped memory for tpu_custom_call.1']
    #allocation10 [shape = 'u8[4096]{0}', space=vmem, size = 0x1000, scoped, tag = 'output window, operand 0, single buffered']
    %12 = vsyncpa [#allocation3], 0
    %13 = vsyncpa [#allocation6], 0
    %14 = vsyncpa [#allocation9], 0
    %15 = vsyncpa [#allocation4], 0
    // Predicated region
    $region2: #{tpu_custom_call.1} parent=1 // pred_check
      _
    $region3: #{tpu_custom_call.1} parent=1 // pred_check_branch
      %17 = sbr.rel (0) target = $region5
    $region4: #{tpu_custom_call.1} parent=1 // pred_region
      %s19 = ssub.s32 128, 128
      %20 = vsyncadd [#allocation3], %s19
      %s22 = sshll.u32 [#allocation2], 4
      %s23 = int_to_ptr.vmem [resolvable:$true] %s22
      %25 = dma.hbm_to_vmem [thread:$0]  %s0, 128, %s23, [#allocation3]
    $region5: #{tpu_custom_call.1} parent=1 // pred_fallthru
      _
    // Predicated region
    $region6: #{tpu_custom_call.1} parent=1 // pred_check
      _
    $region7: #{tpu_custom_call.1} parent=1 // pred_check_branch
      %27 = sbr.rel (0) target = $region9
    $region8: #{tpu_custom_call.1} parent=1 // pred_region
      %s29 = ssub.s32 2048, 2048
      %30 = vsyncadd [#allocation6], %s29
      %s31 = sshll.u32 [#allocation5], 4
      %s32 = int_to_ptr.vmem [resolvable:$true] %s31
      %37 = dma.hbm_to_vmem [thread:$0]  %s1, 2048, %s32, [#allocation6], 128, 128, 8
    $region9: #{tpu_custom_call.1} parent=1 // pred_fallthru
      _
    // Predicated region
    $region10: #{tpu_custom_call.1} parent=1 // pred_check
      _
    $region11: #{tpu_custom_call.1} parent=1 // pred_check_branch
      %39 = sbr.rel (0) target = $region13
    $region12: #{tpu_custom_call.1} parent=1 // pred_region
      _
    $region13: #{tpu_custom_call.1} parent=1 // pred_fallthru
      _
    // Predicated region
    $region14: #{tpu_custom_call.1} parent=1 // pred_check
      _
    $region15: #{tpu_custom_call.1} parent=1 // pred_check_branch
      %41 = sbr.rel (0) target = $region17
    $region16: #{tpu_custom_call.1} parent=1 // pred_region
      %s43 = ssub.s32 2048, 2048
      %44 = vsyncadd [#allocation6], %s43
      %s45 = sshll.u32 [#allocation7], 4
      %s46 = int_to_ptr.vmem [resolvable:$true] %s45
      %51 = dma.hbm_to_vmem [thread:$0]  %s3, 2048, %s46, [#allocation6], 128, 128, 8
    $region17: #{tpu_custom_call.1} parent=1 // pred_fallthru
      _
    // Predicated region
    $region18: #{tpu_custom_call.1} parent=1 // pred_check
      _
    $region19: #{tpu_custom_call.1} parent=1 // pred_check_branch
      %53 = sbr.rel (0) target = $region21
    $region20: #{tpu_custom_call.1} parent=1 // pred_region
      _
    $region21: #{tpu_custom_call.1} parent=1 // pred_fallthru
      _
    // Predicated region
    $region22: #{tpu_custom_call.1} parent=1 // pred_check
      _
    $region23: #{tpu_custom_call.1} parent=1 // pred_check_branch
      %55 = sbr.rel (0) target = $region25
    $region24: #{tpu_custom_call.1} parent=1 // pred_region
      %s57 = ssub.s32 2048, 2048
      %58 = vsyncadd [#allocation9], %s57
      %s59 = sshll.u32 [#allocation8], 4
      %s60 = int_to_ptr.vmem [resolvable:$true] %s59
      %65 = dma.hbm_to_vmem [thread:$0]  %s5, 2048, %s60, [#allocation9], 128, 128, 8
    $region25: #{tpu_custom_call.1} parent=1 // pred_fallthru
      _
    // Predicated region
    $region26: #{tpu_custom_call.1} parent=1 // pred_check
      _
    $region27: #{tpu_custom_call.1} parent=1 // pred_check_branch
      %67 = sbr.rel (0) target = $region29
    $region28: #{tpu_custom_call.1} parent=1 // pred_region
      _
    $region29: #{tpu_custom_call.1} parent=1 // pred_fallthru
      _
    // Predicated region
    $region30: #{tpu_custom_call.1} parent=1 // pred_check
      _
    $region31: #{tpu_custom_call.1} parent=1 // pred_check_branch
      %69 = sbr.rel (0) target = $region33
    $region32: #{tpu_custom_call.1} parent=1 // pred_region
      %70 = dma.done [#allocation3], 128
    $region33: #{tpu_custom_call.1} parent=1 // pred_fallthru
      _
    // Predicated region
    $region34: #{tpu_custom_call.1} parent=1 // pred_check
      _
    $region35: #{tpu_custom_call.1} parent=1 // pred_check_branch
      %72 = sbr.rel (0) target = $region37
    $region36: #{tpu_custom_call.1} parent=1 // pred_region
      %73 = dma.done [#allocation6], 2048
    $region37: #{tpu_custom_call.1} parent=1 // pred_fallthru
      _
    // Predicated region
    $region38: #{tpu_custom_call.1} parent=1 // pred_check
      _
    $region39: #{tpu_custom_call.1} parent=1 // pred_check_branch
      %75 = sbr.rel (0) target = $region41
    $region40: #{tpu_custom_call.1} parent=1 // pred_region
      %76 = dma.done [#allocation6], 2048
    $region41: #{tpu_custom_call.1} parent=1 // pred_fallthru
      _
    // Predicated region
    $region42: #{tpu_custom_call.1} parent=1 // pred_check
      _
    $region43: #{tpu_custom_call.1} parent=1 // pred_check_branch
      %78 = sbr.rel (0) target = $region45
    $region44: #{tpu_custom_call.1} parent=1 // pred_region
      %79 = dma.done [#allocation9], 2048
    $region45: #{tpu_custom_call.1} parent=1 // pred_fallthru
      _
    %v80 = vld [vmem:[#allocation2] sm:$0xff]
    %v81 = vld [vmem:[#allocation5] sm:$0xff]
    %v82 = vld [vmem:[#allocation5 + $0x8] sm:$0xff]
    %v83 = vld [vmem:[#allocation5 + $0x10] sm:$0xff]
    %v84 = vld [vmem:[#allocation5 + $0x18] sm:$0xff]
    %v85 = vld [vmem:[#allocation5 + $0x20] sm:$0xff]
    %v86 = vld [vmem:[#allocation5 + $0x28] sm:$0xff]
    %v87 = vld [vmem:[#allocation5 + $0x30] sm:$0xff]
    %v88 = vld [vmem:[#allocation5 + $0x38] sm:$0xff]
    %v89 = vld [vmem:[#allocation5 + $0x40] sm:$0xff]
    %v90 = vld [vmem:[#allocation5 + $0x48] sm:$0xff]
    %v91 = vld [vmem:[#allocation5 + $0x50] sm:$0xff]
    %v92 = vld [vmem:[#allocation5 + $0x58] sm:$0xff]
    %v93 = vld [vmem:[#allocation5 + $0x60] sm:$0xff]
    %v94 = vld [vmem:[#allocation5 + $0x68] sm:$0xff]
    %v95 = vld [vmem:[#allocation5 + $0x70] sm:$0xff]
    %v96 = vld [vmem:[#allocation5 + $0x78] sm:$0xff]
    %v97 = vld [vmem:[%s2] sm:$0x1]
    %v99 = vlaneseq
    %v100 = vshrl.u32 %v99, 7
    %v101 = vsub.s32 0, %v100
    %v102 = vrot.slane %v97, %v101
    %104 = vmatprep.subr.mxu0 0.0
    %105 = vmatpush1.msra.mxu0 %v81
    %106 = vmatprep.subr.mxu0 0.0
    %107 = vmatpush1.msra.mxu0 %v82
    %108 = vmatprep.subr.mxu0 0.0
    %109 = vmatpush1.msra.mxu0 %v83
    %110 = vmatprep.subr.mxu0 0.0
    %111 = vmatpush1.msra.mxu0 %v84
    %112 = vmatprep.subr.mxu0 0.0
    %113 = vmatpush1.msra.mxu0 %v85
    %114 = vmatprep.subr.mxu0 0.0
    %115 = vmatpush1.msra.mxu0 %v86
    %116 = vmatprep.subr.mxu0 0.0
    %117 = vmatpush1.msra.mxu0 %v87
    %118 = vmatprep.subr.mxu0 0.0
    %119 = vmatpush1.msra.mxu0 %v88
    %120 = vmatprep.subr.mxu0 0.0
    %121 = vmatpush1.msra.mxu0 %v89
    %122 = vmatprep.subr.mxu0 0.0
    %123 = vmatpush1.msra.mxu0 %v90
    %124 = vmatprep.subr.mxu0 0.0
    %125 = vmatpush1.msra.mxu0 %v91
    %126 = vmatprep.subr.mxu0 0.0
    %127 = vmatpush1.msra.mxu0 %v92
    %128 = vmatprep.subr.mxu0 0.0
    %129 = vmatpush1.msra.mxu0 %v93
    %130 = vmatprep.subr.mxu0 0.0
    %131 = vmatpush1.msra.mxu0 %v94
    %132 = vmatprep.subr.mxu0 0.0
    %133 = vmatpush1.msra.mxu0 %v95
    %134 = vmatprep.subr.mxu0 0.0
    %135 = vmatpush1.msra.mxu0 %v96
    %136 = vmatprep.subr.mxu0 0.0
    %137 = vmatpush1.msra.mxu0 0.0
    %138 = vmatprep.subr.mxu0 0.0
    %139 = vmatpush1.msra.mxu0 0.0
    %140 = vmatprep.subr.mxu0 0.0
    %141 = vmatpush1.msra.mxu0 0.0
    %142 = vmatprep.subr.mxu0 0.0
    %143 = vmatpush1.msra.mxu0 0.0
    %144 = vmatprep.subr.mxu0 0.0
    %145 = vmatpush1.msra.mxu0 0.0
    %146 = vmatprep.subr.mxu0 0.0
    %147 = vmatpush1.msra.mxu0 0.0
    %148 = vmatprep.subr.mxu0 0.0
    %149 = vmatpush1.msra.mxu0 0.0
    %150 = vmatprep.subr.mxu0 0.0
    %151 = vmatpush1.msra.mxu0 0.0
    %152 = vmatprep.subr.mxu0 0.0
    %153 = vmatpush1.msra.mxu0 0.0
    %154 = vmatprep.subr.mxu0 0.0
    %155 = vmatpush1.msra.mxu0 0.0
    %156 = vmatprep.subr.mxu0 0.0
    %157 = vmatpush1.msra.mxu0 0.0
    %158 = vmatprep.subr.mxu0 0.0
    %159 = vmatpush1.msra.mxu0 0.0
    %160 = vmatprep.subr.mxu0 0.0
    %161 = vmatpush1.msra.mxu0 0.0
    %162 = vmatprep.subr.mxu0 0.0
    %163 = vmatpush1.msra.mxu0 0.0
    %164 = vmatprep.subr.mxu0 0.0
    %165 = vmatpush1.msra.mxu0 0.0
    %166 = vmatprep.subr.mxu0 0.0
    %167 = vmatpush1.msra.mxu0 0.0
    %168 = vmatprep.mubr.f32.mxu0 0.0
    %169 = vmatmul.mubr.f32.gmra.mrb[0].mxu0 %v80
    %v170 = vpop.f32.mrb[0].mxu0
    %v171 = vadd.f32 %v102, %v170
    %v172 = vpop.f32.mrb[0].mxu0
    %173 = vdwg.mxu0
    %vm174 = vcmp.ge.f32.partialorder %v171, 0.0
    %v175 = vmul.f32 %v171, 0.01
    %v176 = vsel %vm174, %v171, %v175
    %v177 = vld [vmem:[#allocation7] sm:$0xff]
    %v178 = vld [vmem:[#allocation7 + $0x8] sm:$0xff]
    %v179 = vld [vmem:[#allocation7 + $0x10] sm:$0xff]
    %v180 = vld [vmem:[#allocation7 + $0x18] sm:$0xff]
    %v181 = vld [vmem:[#allocation7 + $0x20] sm:$0xff]
    %v182 = vld [vmem:[#allocation7 + $0x28] sm:$0xff]
    %v183 = vld [vmem:[#allocation7 + $0x30] sm:$0xff]
    %v184 = vld [vmem:[#allocation7 + $0x38] sm:$0xff]
    %v185 = vld [vmem:[#allocation7 + $0x40] sm:$0xff]
    %v186 = vld [vmem:[#allocation7 + $0x48] sm:$0xff]
    %v187 = vld [vmem:[#allocation7 + $0x50] sm:$0xff]
    %v188 = vld [vmem:[#allocation7 + $0x58] sm:$0xff]
    %v189 = vld [vmem:[#allocation7 + $0x60] sm:$0xff]
    %v190 = vld [vmem:[#allocation7 + $0x68] sm:$0xff]
    %v191 = vld [vmem:[#allocation7 + $0x70] sm:$0xff]
    %v192 = vld [vmem:[#allocation7 + $0x78] sm:$0xff]
    %v193 = vld [vmem:[%s4] sm:$0x1]
    %v195 = vlaneseq
    %v196 = vshrl.u32 %v195, 7
    %v197 = vsub.s32 0, %v196
    %v198 = vrot.slane %v193, %v197
    %200 = vmatprep.subr.mxu0 0.0
    %201 = vmatpush1.msra.mxu0 %v177
    %202 = vmatprep.subr.mxu0 0.0
    %203 = vmatpush1.msra.mxu0 %v178
    %204 = vmatprep.subr.mxu0 0.0
    %205 = vmatpush1.msra.mxu0 %v179
    %206 = vmatprep.subr.mxu0 0.0
    %207 = vmatpush1.msra.mxu0 %v180
    %208 = vmatprep.subr.mxu0 0.0
    %209 = vmatpush1.msra.mxu0 %v181
    %210 = vmatprep.subr.mxu0 0.0
    %211 = vmatpush1.msra.mxu0 %v182
    %212 = vmatprep.subr.mxu0 0.0
    %213 = vmatpush1.msra.mxu0 %v183
    %214 = vmatprep.subr.mxu0 0.0
    %215 = vmatpush1.msra.mxu0 %v184
    %216 = vmatprep.subr.mxu0 0.0
    %217 = vmatpush1.msra.mxu0 %v185
    %218 = vmatprep.subr.mxu0 0.0
    %219 = vmatpush1.msra.mxu0 %v186
    %220 = vmatprep.subr.mxu0 0.0
    %221 = vmatpush1.msra.mxu0 %v187
    %222 = vmatprep.subr.mxu0 0.0
    %223 = vmatpush1.msra.mxu0 %v188
    %224 = vmatprep.subr.mxu0 0.0
    %225 = vmatpush1.msra.mxu0 %v189
    %226 = vmatprep.subr.mxu0 0.0
    %227 = vmatpush1.msra.mxu0 %v190
    %228 = vmatprep.subr.mxu0 0.0
    %229 = vmatpush1.msra.mxu0 %v191
    %230 = vmatprep.subr.mxu0 0.0
    %231 = vmatpush1.msra.mxu0 %v192
    %232 = vmatprep.subr.mxu0 0.0
    %233 = vmatpush1.msra.mxu0 0.0
    %234 = vmatprep.subr.mxu0 0.0
    %235 = vmatpush1.msra.mxu0 0.0
    %236 = vmatprep.subr.mxu0 0.0
    %237 = vmatpush1.msra.mxu0 0.0
    %238 = vmatprep.subr.mxu0 0.0
    %239 = vmatpush1.msra.mxu0 0.0
    %240 = vmatprep.subr.mxu0 0.0
    %241 = vmatpush1.msra.mxu0 0.0
    %242 = vmatprep.subr.mxu0 0.0
    %243 = vmatpush1.msra.mxu0 0.0
    %244 = vmatprep.subr.mxu0 0.0
    %245 = vmatpush1.msra.mxu0 0.0
    %246 = vmatprep.subr.mxu0 0.0
    %247 = vmatpush1.msra.mxu0 0.0
    %248 = vmatprep.subr.mxu0 0.0
    %249 = vmatpush1.msra.mxu0 0.0
    %250 = vmatprep.subr.mxu0 0.0
    %251 = vmatpush1.msra.mxu0 0.0
    %252 = vmatprep.subr.mxu0 0.0
    %253 = vmatpush1.msra.mxu0 0.0
    %254 = vmatprep.subr.mxu0 0.0
    %255 = vmatpush1.msra.mxu0 0.0
    %256 = vmatprep.subr.mxu0 0.0
    %257 = vmatpush1.msra.mxu0 0.0
    %258 = vmatprep.subr.mxu0 0.0
    %259 = vmatpush1.msra.mxu0 0.0
    %260 = vmatprep.subr.mxu0 0.0
    %261 = vmatpush1.msra.mxu0 0.0
    %262 = vmatprep.subr.mxu0 0.0
    %263 = vmatpush1.msra.mxu0 0.0
    %264 = vmatprep.mubr.f32.mxu0 0.0
    %265 = vmatmul.mubr.f32.gmra.mrb[0].mxu0 %v176
    %v266 = vpop.f32.mrb[0].mxu0
    %v267 = vadd.f32 %v198, %v266
    %v268 = vpop.f32.mrb[0].mxu0
    %269 = vdwg.mxu0
    %vm270 = vcmp.ge.f32.partialorder %v267, 0.0
    %v271 = vmul.f32 %v267, 0.01
    %v272 = vsel %vm270, %v267, %v271
    %v273 = vld [vmem:[#allocation8] sm:$0xff]
    %v274 = vld [vmem:[#allocation8 + $0x8] sm:$0xff]
    %v275 = vld [vmem:[#allocation8 + $0x10] sm:$0xff]
    %v276 = vld [vmem:[#allocation8 + $0x18] sm:$0xff]
    %v277 = vld [vmem:[#allocation8 + $0x20] sm:$0xff]
    %v278 = vld [vmem:[#allocation8 + $0x28] sm:$0xff]
    %v279 = vld [vmem:[#allocation8 + $0x30] sm:$0xff]
    %v280 = vld [vmem:[#allocation8 + $0x38] sm:$0xff]
    %v281 = vld [vmem:[#allocation8 + $0x40] sm:$0xff]
    %v282 = vld [vmem:[#allocation8 + $0x48] sm:$0xff]
    %v283 = vld [vmem:[#allocation8 + $0x50] sm:$0xff]
    %v284 = vld [vmem:[#allocation8 + $0x58] sm:$0xff]
    %v285 = vld [vmem:[#allocation8 + $0x60] sm:$0xff]
    %v286 = vld [vmem:[#allocation8 + $0x68] sm:$0xff]
    %v287 = vld [vmem:[#allocation8 + $0x70] sm:$0xff]
    %v288 = vld [vmem:[#allocation8 + $0x78] sm:$0xff]
    %v289 = vld [vmem:[%s6] sm:$0x1]
    %v291 = vlaneseq
    %v292 = vshrl.u32 %v291, 7
    %v293 = vsub.s32 0, %v292
    %v294 = vrot.slane %v289, %v293
    %296 = vmatprep.subr.mxu0 0.0
    %297 = vmatpush1.msra.mxu0 %v273
    %298 = vmatprep.subr.mxu0 0.0
    %299 = vmatpush1.msra.mxu0 %v274
    %300 = vmatprep.subr.mxu0 0.0
    %301 = vmatpush1.msra.mxu0 %v275
    %302 = vmatprep.subr.mxu0 0.0
    %303 = vmatpush1.msra.mxu0 %v276
    %304 = vmatprep.subr.mxu0 0.0
    %305 = vmatpush1.msra.mxu0 %v277
    %306 = vmatprep.subr.mxu0 0.0
    %307 = vmatpush1.msra.mxu0 %v278
    %308 = vmatprep.subr.mxu0 0.0
    %309 = vmatpush1.msra.mxu0 %v279
    %310 = vmatprep.subr.mxu0 0.0
    %311 = vmatpush1.msra.mxu0 %v280
    %312 = vmatprep.subr.mxu0 0.0
    %313 = vmatpush1.msra.mxu0 %v281
    %314 = vmatprep.subr.mxu0 0.0
    %315 = vmatpush1.msra.mxu0 %v282
    %316 = vmatprep.subr.mxu0 0.0
    %317 = vmatpush1.msra.mxu0 %v283
    %318 = vmatprep.subr.mxu0 0.0
    %319 = vmatpush1.msra.mxu0 %v284
    %320 = vmatprep.subr.mxu0 0.0
    %321 = vmatpush1.msra.mxu0 %v285
    %322 = vmatprep.subr.mxu0 0.0
    %323 = vmatpush1.msra.mxu0 %v286
    %324 = vmatprep.subr.mxu0 0.0
    %325 = vmatpush1.msra.mxu0 %v287
    %326 = vmatprep.subr.mxu0 0.0
    %327 = vmatpush1.msra.mxu0 %v288
    %328 = vmatprep.subr.mxu0 0.0
    %329 = vmatpush1.msra.mxu0 0.0
    %330 = vmatprep.subr.mxu0 0.0
    %331 = vmatpush1.msra.mxu0 0.0
    %332 = vmatprep.subr.mxu0 0.0
    %333 = vmatpush1.msra.mxu0 0.0
    %334 = vmatprep.subr.mxu0 0.0
    %335 = vmatpush1.msra.mxu0 0.0
    %336 = vmatprep.subr.mxu0 0.0
    %337 = vmatpush1.msra.mxu0 0.0
    %338 = vmatprep.subr.mxu0 0.0
    %339 = vmatpush1.msra.mxu0 0.0
    %340 = vmatprep.subr.mxu0 0.0
    %341 = vmatpush1.msra.mxu0 0.0
    %342 = vmatprep.subr.mxu0 0.0
    %343 = vmatpush1.msra.mxu0 0.0
    %344 = vmatprep.subr.mxu0 0.0
    %345 = vmatpush1.msra.mxu0 0.0
    %346 = vmatprep.subr.mxu0 0.0
    %347 = vmatpush1.msra.mxu0 0.0
    %348 = vmatprep.subr.mxu0 0.0
    %349 = vmatpush1.msra.mxu0 0.0
    %350 = vmatprep.subr.mxu0 0.0
    %351 = vmatpush1.msra.mxu0 0.0
    %352 = vmatprep.subr.mxu0 0.0
    %353 = vmatpush1.msra.mxu0 0.0
    %354 = vmatprep.subr.mxu0 0.0
    %355 = vmatpush1.msra.mxu0 0.0
    %356 = vmatprep.subr.mxu0 0.0
    %357 = vmatpush1.msra.mxu0 0.0
    %358 = vmatprep.subr.mxu0 0.0
    %359 = vmatpush1.msra.mxu0 0.0
    %360 = vmatprep.mubr.f32.mxu0 0.0
    %361 = vmatmul.mubr.f32.gmra.mrb[0].mxu0 %v272
    %v362 = vpop.f32.mrb[0].mxu0
    %v363 = vadd.f32 %v294, %v362
    %v364 = vpop.f32.mrb[0].mxu0
    %365 = vdwg.mxu0
    %366 = vst [vmem:[#allocation10] sm:$0xff] %v363
    // Predicated region
    $region46: #{tpu_custom_call.1} parent=1 // pred_check
      _
    $region47: #{tpu_custom_call.1} parent=1 // pred_check_branch
      %368 = sbr.rel (0) target = $region49
    $region48: #{tpu_custom_call.1} parent=1 // pred_region
      %s370 = ssub.s32 128, 128
      %371 = vsyncadd [#allocation4], %s370
      %s373 = sshll.u32 [#allocation10], 4
      %s374 = int_to_ptr.vmem [resolvable:$true] %s373
      %376 = dma.vmem_to_hbm [thread:$0]  %s374, 128, %s7, [#allocation4]
    $region49: #{tpu_custom_call.1} parent=1 // pred_fallthru
      _
    // Predicated region
    $region50: #{tpu_custom_call.1} parent=1 // pred_check
      _
    $region51: #{tpu_custom_call.1} parent=1 // pred_check_branch
      %378 = sbr.rel (0) target = $region53
    $region52: #{tpu_custom_call.1} parent=1 // pred_region
      %379 = dma.done [#allocation4], 128
    $region53: #{tpu_custom_call.1} parent=1 // pred_fallthru
      _
    %380 = vsyncpa [#allocation3], 1
    %381 = vsyncpa [#allocation6], 1
    %382 = vsyncpa [#allocation9], 1
    %383 = vsyncpa [#allocation4], 1

// kernel: tpu_custom_call.1
$region0: #{tpu_custom_call.1}
  #allocation0 [shape = 'u32[]', space=smem, size = 0x4, offset = 0x4, fixed_abs, tag = 'smem constant byte address 0x4 - core index']
  #allocation1 [shape = 'u32[144,128]{1,0:T(1,128)}', space=vmem, size = 0x12000, scoped, tag = 'internal scratch']
  %s0 = inlined_call_operand.hbm [shape: f32[8,128], index: 0, kind: input, shape index: {}]
  %s1 = inlined_call_operand.hbm [shape: f32[128,128], index: 1, kind: input, shape index: {}]
  %s2 = inlined_call_operand.vmem [shape: f32[1,128], index: 2, kind: input, shape index: {}]
  %s3 = inlined_call_operand.hbm [shape: f32[128,128], index: 3, kind: input, shape index: {}]
  %s4 = inlined_call_operand.vmem [shape: f32[1,128], index: 4, kind: input, shape index: {}]
  %s5 = inlined_call_operand.hbm [shape: f32[128,128], index: 5, kind: input, shape index: {}]
  %s6 = inlined_call_operand.vmem [shape: f32[1,128], index: 6, kind: input, shape index: {}]
  %s7 = inlined_call_operand.hbm [shape: f32[8,128], index: 7, kind: output, shape index: {}]
  %s8 = sld [smem:[#allocation0]]
  $region54: #{tpu_custom_call.1} parent=0
    _
  %s10 = ssub.s32 1, %s8
  %s11 = scalar_select 0, %s10, %s8
  $region1: #{tpu_custom_call.1} parent=0
    #allocation2 [shape = 'u8[4096]{0}', space=vmem, size = 0x1000, scoped, tag = 'input window, operand 0, single buffered']
    #allocation3 [shape = 's32[1]{0}', space=sflag, size = 0x4, scoped, tag = 'scoped memory for tpu_custom_call.1']
    #allocation4 [shape = 's32[1]{0}', space=sflag, size = 0x4, scoped, tag = 'scoped memory for tpu_custom_call.1']
    #allocation5 [shape = 'u8[65536]{0}', space=vmem, size = 0x10000, scoped, tag = 'input window, operand 1, single buffered']
    #allocation6 [shape = 's32[1]{0}', space=sflag, size = 0x4, scoped, tag = 'scoped memory for tpu_custom_call.1']
    #allocation7 [shape = 'u8[65536]{0}', space=vmem, size = 0x10000, scoped, tag = 'input window, operand 3, single buffered']
    #allocation8 [shape = 'u8[65536]{0}', space=vmem, size = 0x10000, scoped, tag = 'input window, operand 5, single buffered']
    #allocation9 [shape = 's32[1]{0}', space=sflag, size = 0x4, scoped, tag = 'scoped memory for tpu_custom_call.1']
    #allocation10 [shape = 'u8[4096]{0}', space=vmem, size = 0x1000, scoped, tag = 'output window, operand 0, single buffered']
    %12 = vsyncpa [#allocation3], 0
    %13 = vsyncpa [#allocation6], 0
    %14 = vsyncpa [#allocation9], 0
    %15 = vsyncpa [#allocation4], 0
    // Predicated region
    $region2: #{tpu_custom_call.1} parent=1 // pred_check
      _
    $region3: #{tpu_custom_call.1} parent=1 // pred_check_branch
      %17 = sbr.rel (0) target = $region5
    $region4: #{tpu_custom_call.1} parent=1 // pred_region
      %s19 = ssub.s32 128, 128
      %20 = vsyncadd [#allocation3], %s19
      %s22 = sshll.u32 [#allocation2], 4
      %s23 = int_to_ptr.vmem [resolvable:$true] %s22
      %25 = dma.hbm_to_vmem [thread:$0]  %s0, 128, %s23, [#allocation3]
    $region5: #{tpu_custom_call.1} parent=1 // pred_fallthru
      _
    // Predicated region
    $region6: #{tpu_custom_call.1} parent=1 // pred_check
      _
    $region7: #{tpu_custom_call.1} parent=1 // pred_check_branch
      %27 = sbr.rel (0) target = $region9
    $region8: #{tpu_custom_call.1} parent=1 // pred_region
      %s29 = ssub.s32 2048, 2048
      %30 = vsyncadd [#allocation6], %s29
      %s31 = sshll.u32 [#allocation5], 4
      %s32 = int_to_ptr.vmem [resolvable:$true] %s31
      %37 = dma.hbm_to_vmem [thread:$0]  %s1, 2048, %s32, [#allocation6], 128, 128, 8
    $region9: #{tpu_custom_call.1} parent=1 // pred_fallthru
      _
    // Predicated region
    $region10: #{tpu_custom_call.1} parent=1 // pred_check
      _
    $region11: #{tpu_custom_call.1} parent=1 // pred_check_branch
      %39 = sbr.rel (0) target = $region13
    $region12: #{tpu_custom_call.1} parent=1 // pred_region
      _
    $region13: #{tpu_custom_call.1} parent=1 // pred_fallthru
      _
    // Predicated region
    $region14: #{tpu_custom_call.1} parent=1 // pred_check
      _
    $region15: #{tpu_custom_call.1} parent=1 // pred_check_branch
      %41 = sbr.rel (0) target = $region17
    $region16: #{tpu_custom_call.1} parent=1 // pred_region
      %s43 = ssub.s32 2048, 2048
      %44 = vsyncadd [#allocation6], %s43
      %s45 = sshll.u32 [#allocation7], 4
      %s46 = int_to_ptr.vmem [resolvable:$true] %s45
      %51 = dma.hbm_to_vmem [thread:$0]  %s3, 2048, %s46, [#allocation6], 128, 128, 8
    $region17: #{tpu_custom_call.1} parent=1 // pred_fallthru
      _
    // Predicated region
    $region18: #{tpu_custom_call.1} parent=1 // pred_check
      _
    $region19: #{tpu_custom_call.1} parent=1 // pred_check_branch
      %53 = sbr.rel (0) target = $region21
    $region20: #{tpu_custom_call.1} parent=1 // pred_region
      _
    $region21: #{tpu_custom_call.1} parent=1 // pred_fallthru
      _
    // Predicated region
    $region22: #{tpu_custom_call.1} parent=1 // pred_check
      _
    $region23: #{tpu_custom_call.1} parent=1 // pred_check_branch
      %55 = sbr.rel (0) target = $region25
    $region24: #{tpu_custom_call.1} parent=1 // pred_region
      %s57 = ssub.s32 2048, 2048
      %58 = vsyncadd [#allocation9], %s57
      %s59 = sshll.u32 [#allocation8], 4
      %s60 = int_to_ptr.vmem [resolvable:$true] %s59
      %65 = dma.hbm_to_vmem [thread:$0]  %s5, 2048, %s60, [#allocation9], 128, 128, 8
    $region25: #{tpu_custom_call.1} parent=1 // pred_fallthru
      _
    // Predicated region
    $region26: #{tpu_custom_call.1} parent=1 // pred_check
      _
    $region27: #{tpu_custom_call.1} parent=1 // pred_check_branch
      %67 = sbr.rel (0) target = $region29
    $region28: #{tpu_custom_call.1} parent=1 // pred_region
      _
    $region29: #{tpu_custom_call.1} parent=1 // pred_fallthru
      _
    // Predicated region
    $region30: #{tpu_custom_call.1} parent=1 // pred_check
      _
    $region31: #{tpu_custom_call.1} parent=1 // pred_check_branch
      %69 = sbr.rel (0) target = $region33
    $region32: #{tpu_custom_call.1} parent=1 // pred_region
      %70 = dma.done [#allocation3], 128
    $region33: #{tpu_custom_call.1} parent=1 // pred_fallthru
      _
    // Predicated region
    $region34: #{tpu_custom_call.1} parent=1 // pred_check
      _
    $region35: #{tpu_custom_call.1} parent=1 // pred_check_branch
      %72 = sbr.rel (0) target = $region37
    $region36: #{tpu_custom_call.1} parent=1 // pred_region
      %73 = dma.done [#allocation6], 2048
    $region37: #{tpu_custom_call.1} parent=1 // pred_fallthru
      _
    // Predicated region
    $region38: #{tpu_custom_call.1} parent=1 // pred_check
      _
    $region39: #{tpu_custom_call.1} parent=1 // pred_check_branch
      %75 = sbr.rel (0) target = $region41
    $region40: #{tpu_custom_call.1} parent=1 // pred_region
      %76 = dma.done [#allocation6], 2048
    $region41: #{tpu_custom_call.1} parent=1 // pred_fallthru
      _
    // Predicated region
    $region42: #{tpu_custom_call.1} parent=1 // pred_check
      _
    $region43: #{tpu_custom_call.1} parent=1 // pred_check_branch
      %78 = sbr.rel (0) target = $region45
    $region44: #{tpu_custom_call.1} parent=1 // pred_region
      %79 = dma.done [#allocation9], 2048
    $region45: #{tpu_custom_call.1} parent=1 // pred_fallthru
      _
    %v80 = vld [vmem:[#allocation2] sm:$0xff]
    %v81 = vld [vmem:[#allocation5] sm:$0xff]
    %v82 = vld [vmem:[#allocation5 + $0x8] sm:$0xff]
    %v83 = vld [vmem:[#allocation5 + $0x10] sm:$0xff]
    %v84 = vld [vmem:[#allocation5 + $0x18] sm:$0xff]
    %v85 = vld [vmem:[#allocation5 + $0x20] sm:$0xff]
    %v86 = vld [vmem:[#allocation5 + $0x28] sm:$0xff]
    %v87 = vld [vmem:[#allocation5 + $0x30] sm:$0xff]
    %v88 = vld [vmem:[#allocation5 + $0x38] sm:$0xff]
    %v89 = vld [vmem:[#allocation5 + $0x40] sm:$0xff]
    %v90 = vld [vmem:[#allocation5 + $0x48] sm:$0xff]
    %v91 = vld [vmem:[#allocation5 + $0x50] sm:$0xff]
    %v92 = vld [vmem:[#allocation5 + $0x58] sm:$0xff]
    %v93 = vld [vmem:[#allocation5 + $0x60] sm:$0xff]
    %v94 = vld [vmem:[#allocation5 + $0x68] sm:$0xff]
    %v95 = vld [vmem:[#allocation5 + $0x70] sm:$0xff]
    %v96 = vld [vmem:[#allocation5 + $0x78] sm:$0xff]
    %v97 = vld [vmem:[%s2] sm:$0x1]
    %v99 = vlaneseq
    %v100 = vshrl.u32 %v99, 7
    %v101 = vsub.s32 0, %v100
    %v102 = vrot.slane %v97, %v101
    %104 = vmatprep.subr.mxu0 0.0
    %105 = vmatpush1.msra.mxu0 %v81
    %106 = vmatprep.subr.mxu0 0.0
    %107 = vmatpush1.msra.mxu0 %v82
    %108 = vmatprep.subr.mxu0 0.0
    %109 = vmatpush1.msra.mxu0 %v83
    %110 = vmatprep.subr.mxu0 0.0
    %111 = vmatpush1.msra.mxu0 %v84
    %112 = vmatprep.subr.mxu0 0.0
    %113 = vmatpush1.msra.mxu0 %v85
    %114 = vmatprep.subr.mxu0 0.0
    %115 = vmatpush1.msra.mxu0 %v86
    %116 = vmatprep.subr.mxu0 0.0
    %117 = vmatpush1.msra.mxu0 %v87
    %118 = vmatprep.subr.mxu0 0.0
    %119 = vmatpush1.msra.mxu0 %v88
    %120 = vmatprep.subr.mxu0 0.0
    %121 = vmatpush1.msra.mxu0 %v89
    %122 = vmatprep.subr.mxu0 0.0
    %123 = vmatpush1.msra.mxu0 %v90
    %124 = vmatprep.subr.mxu0 0.0
    %125 = vmatpush1.msra.mxu0 %v91
    %126 = vmatprep.subr.mxu0 0.0
    %127 = vmatpush1.msra.mxu0 %v92
    %128 = vmatprep.subr.mxu0 0.0
    %129 = vmatpush1.msra.mxu0 %v93
    %130 = vmatprep.subr.mxu0 0.0
    %131 = vmatpush1.msra.mxu0 %v94
    %132 = vmatprep.subr.mxu0 0.0
    %133 = vmatpush1.msra.mxu0 %v95
    %134 = vmatprep.subr.mxu0 0.0
    %135 = vmatpush1.msra.mxu0 %v96
    %136 = vmatprep.subr.mxu0 0.0
    %137 = vmatpush1.msra.mxu0 0.0
    %138 = vmatprep.subr.mxu0 0.0
    %139 = vmatpush1.msra.mxu0 0.0
    %140 = vmatprep.subr.mxu0 0.0
    %141 = vmatpush1.msra.mxu0 0.0
    %142 = vmatprep.subr.mxu0 0.0
    %143 = vmatpush1.msra.mxu0 0.0
    %144 = vmatprep.subr.mxu0 0.0
    %145 = vmatpush1.msra.mxu0 0.0
    %146 = vmatprep.subr.mxu0 0.0
    %147 = vmatpush1.msra.mxu0 0.0
    %148 = vmatprep.subr.mxu0 0.0
    %149 = vmatpush1.msra.mxu0 0.0
    %150 = vmatprep.subr.mxu0 0.0
    %151 = vmatpush1.msra.mxu0 0.0
    %152 = vmatprep.subr.mxu0 0.0
    %153 = vmatpush1.msra.mxu0 0.0
    %154 = vmatprep.subr.mxu0 0.0
    %155 = vmatpush1.msra.mxu0 0.0
    %156 = vmatprep.subr.mxu0 0.0
    %157 = vmatpush1.msra.mxu0 0.0
    %158 = vmatprep.subr.mxu0 0.0
    %159 = vmatpush1.msra.mxu0 0.0
    %160 = vmatprep.subr.mxu0 0.0
    %161 = vmatpush1.msra.mxu0 0.0
    %162 = vmatprep.subr.mxu0 0.0
    %163 = vmatpush1.msra.mxu0 0.0
    %164 = vmatprep.subr.mxu0 0.0
    %165 = vmatpush1.msra.mxu0 0.0
    %166 = vmatprep.subr.mxu0 0.0
    %167 = vmatpush1.msra.mxu0 0.0
    %168 = vmatprep.mubr.f32.mxu0 0.0
    %169 = vmatmul.mubr.f32.gmra.mrb[0].mxu0 %v80
    %v170 = vpop.f32.mrb[0].mxu0
    %v171 = vadd.f32 %v102, %v170
    %v172 = vpop.f32.mrb[0].mxu0
    %173 = vdwg.mxu0
    %vm174 = vcmp.ge.f32.partialorder %v171, 0.0
    %v175 = vmul.f32 %v171, 0.01
    %v176 = vsel %vm174, %v171, %v175
    %v177 = vld [vmem:[#allocation7] sm:$0xff]
    %v178 = vld [vmem:[#allocation7 + $0x8] sm:$0xff]
    %v179 = vld [vmem:[#allocation7 + $0x10] sm:$0xff]
    %v180 = vld [vmem:[#allocation7 + $0x18] sm:$0xff]
    %v181 = vld [vmem:[#allocation7 + $0x20] sm:$0xff]
    %v182 = vld [vmem:[#allocation7 + $0x28] sm:$0xff]
    %v183 = vld [vmem:[#allocation7 + $0x30] sm:$0xff]
    %v184 = vld [vmem:[#allocation7 + $0x38] sm:$0xff]
    %v185 = vld [vmem:[#allocation7 + $0x40] sm:$0xff]
    %v186 = vld [vmem:[#allocation7 + $0x48] sm:$0xff]
    %v187 = vld [vmem:[#allocation7 + $0x50] sm:$0xff]
    %v188 = vld [vmem:[#allocation7 + $0x58] sm:$0xff]
    %v189 = vld [vmem:[#allocation7 + $0x60] sm:$0xff]
    %v190 = vld [vmem:[#allocation7 + $0x68] sm:$0xff]
    %v191 = vld [vmem:[#allocation7 + $0x70] sm:$0xff]
    %v192 = vld [vmem:[#allocation7 + $0x78] sm:$0xff]
    %v193 = vld [vmem:[%s4] sm:$0x1]
    %v195 = vlaneseq
    %v196 = vshrl.u32 %v195, 7
    %v197 = vsub.s32 0, %v196
    %v198 = vrot.slane %v193, %v197
    %200 = vmatprep.subr.mxu0 0.0
    %201 = vmatpush1.msra.mxu0 %v177
    %202 = vmatprep.subr.mxu0 0.0
    %203 = vmatpush1.msra.mxu0 %v178
    %204 = vmatprep.subr.mxu0 0.0
    %205 = vmatpush1.msra.mxu0 %v179
    %206 = vmatprep.subr.mxu0 0.0
    %207 = vmatpush1.msra.mxu0 %v180
    %208 = vmatprep.subr.mxu0 0.0
    %209 = vmatpush1.msra.mxu0 %v181
    %210 = vmatprep.subr.mxu0 0.0
    %211 = vmatpush1.msra.mxu0 %v182
    %212 = vmatprep.subr.mxu0 0.0
    %213 = vmatpush1.msra.mxu0 %v183
    %214 = vmatprep.subr.mxu0 0.0
    %215 = vmatpush1.msra.mxu0 %v184
    %216 = vmatprep.subr.mxu0 0.0
    %217 = vmatpush1.msra.mxu0 %v185
    %218 = vmatprep.subr.mxu0 0.0
    %219 = vmatpush1.msra.mxu0 %v186
    %220 = vmatprep.subr.mxu0 0.0
    %221 = vmatpush1.msra.mxu0 %v187
    %222 = vmatprep.subr.mxu0 0.0
    %223 = vmatpush1.msra.mxu0 %v188
    %224 = vmatprep.subr.mxu0 0.0
    %225 = vmatpush1.msra.mxu0 %v189
    %226 = vmatprep.subr.mxu0 0.0
    %227 = vmatpush1.msra.mxu0 %v190
    %228 = vmatprep.subr.mxu0 0.0
    %229 = vmatpush1.msra.mxu0 %v191
    %230 = vmatprep.subr.mxu0 0.0
    %231 = vmatpush1.msra.mxu0 %v192
    %232 = vmatprep.subr.mxu0 0.0
    %233 = vmatpush1.msra.mxu0 0.0
    %234 = vmatprep.subr.mxu0 0.0
    %235 = vmatpush1.msra.mxu0 0.0
    %236 = vmatprep.subr.mxu0 0.0
    %237 = vmatpush1.msra.mxu0 0.0
    %238 = vmatprep.subr.mxu0 0.0
    %239 = vmatpush1.msra.mxu0 0.0
    %240 = vmatprep.subr.mxu0 0.0
    %241 = vmatpush1.msra.mxu0 0.0
    %242 = vmatprep.subr.mxu0 0.0
    %243 = vmatpush1.msra.mxu0 0.0
    %244 = vmatprep.subr.mxu0 0.0
    %245 = vmatpush1.msra.mxu0 0.0
    %246 = vmatprep.subr.mxu0 0.0
    %247 = vmatpush1.msra.mxu0 0.0
    %248 = vmatprep.subr.mxu0 0.0
    %249 = vmatpush1.msra.mxu0 0.0
    %250 = vmatprep.subr.mxu0 0.0
    %251 = vmatpush1.msra.mxu0 0.0
    %252 = vmatprep.subr.mxu0 0.0
    %253 = vmatpush1.msra.mxu0 0.0
    %254 = vmatprep.subr.mxu0 0.0
    %255 = vmatpush1.msra.mxu0 0.0
    %256 = vmatprep.subr.mxu0 0.0
    %257 = vmatpush1.msra.mxu0 0.0
    %258 = vmatprep.subr.mxu0 0.0
    %259 = vmatpush1.msra.mxu0 0.0
    %260 = vmatprep.subr.mxu0 0.0
    %261 = vmatpush1.msra.mxu0 0.0
    %262 = vmatprep.subr.mxu0 0.0
    %263 = vmatpush1.msra.mxu0 0.0
    %264 = vmatprep.mubr.f32.mxu0 0.0
    %265 = vmatmul.mubr.f32.gmra.mrb[0].mxu0 %v176
    %v266 = vpop.f32.mrb[0].mxu0
    %v267 = vadd.f32 %v198, %v266
    %v268 = vpop.f32.mrb[0].mxu0
    %269 = vdwg.mxu0
    %vm270 = vcmp.ge.f32.partialorder %v267, 0.0
    %v271 = vmul.f32 %v267, 0.01
    %v272 = vsel %vm270, %v267, %v271
    %v273 = vld [vmem:[#allocation8] sm:$0xff]
    %v274 = vld [vmem:[#allocation8 + $0x8] sm:$0xff]
    %v275 = vld [vmem:[#allocation8 + $0x10] sm:$0xff]
    %v276 = vld [vmem:[#allocation8 + $0x18] sm:$0xff]
    %v277 = vld [vmem:[#allocation8 + $0x20] sm:$0xff]
    %v278 = vld [vmem:[#allocation8 + $0x28] sm:$0xff]
    %v279 = vld [vmem:[#allocation8 + $0x30] sm:$0xff]
    %v280 = vld [vmem:[#allocation8 + $0x38] sm:$0xff]
    %v281 = vld [vmem:[#allocation8 + $0x40] sm:$0xff]
    %v282 = vld [vmem:[#allocation8 + $0x48] sm:$0xff]
    %v283 = vld [vmem:[#allocation8 + $0x50] sm:$0xff]
    %v284 = vld [vmem:[#allocation8 + $0x58] sm:$0xff]
    %v285 = vld [vmem:[#allocation8 + $0x60] sm:$0xff]
    %v286 = vld [vmem:[#allocation8 + $0x68] sm:$0xff]
    %v287 = vld [vmem:[#allocation8 + $0x70] sm:$0xff]
    %v288 = vld [vmem:[#allocation8 + $0x78] sm:$0xff]
    %v289 = vld [vmem:[%s6] sm:$0x1]
    %v291 = vlaneseq
    %v292 = vshrl.u32 %v291, 7
    %v293 = vsub.s32 0, %v292
    %v294 = vrot.slane %v289, %v293
    %296 = vmatprep.subr.mxu0 0.0
    %297 = vmatpush1.msra.mxu0 %v273
    %298 = vmatprep.subr.mxu0 0.0
    %299 = vmatpush1.msra.mxu0 %v274
    %300 = vmatprep.subr.mxu0 0.0
    %301 = vmatpush1.msra.mxu0 %v275
    %302 = vmatprep.subr.mxu0 0.0
    %303 = vmatpush1.msra.mxu0 %v276
    %304 = vmatprep.subr.mxu0 0.0
    %305 = vmatpush1.msra.mxu0 %v277
    %306 = vmatprep.subr.mxu0 0.0
    %307 = vmatpush1.msra.mxu0 %v278
    %308 = vmatprep.subr.mxu0 0.0
    %309 = vmatpush1.msra.mxu0 %v279
    %310 = vmatprep.subr.mxu0 0.0
    %311 = vmatpush1.msra.mxu0 %v280
    %312 = vmatprep.subr.mxu0 0.0
    %313 = vmatpush1.msra.mxu0 %v281
    %314 = vmatprep.subr.mxu0 0.0
    %315 = vmatpush1.msra.mxu0 %v282
    %316 = vmatprep.subr.mxu0 0.0
    %317 = vmatpush1.msra.mxu0 %v283
    %318 = vmatprep.subr.mxu0 0.0
    %319 = vmatpush1.msra.mxu0 %v284
    %320 = vmatprep.subr.mxu0 0.0
    %321 = vmatpush1.msra.mxu0 %v285
    %322 = vmatprep.subr.mxu0 0.0
    %323 = vmatpush1.msra.mxu0 %v286
    %324 = vmatprep.subr.mxu0 0.0
    %325 = vmatpush1.msra.mxu0 %v287
    %326 = vmatprep.subr.mxu0 0.0
    %327 = vmatpush1.msra.mxu0 %v288
    %328 = vmatprep.subr.mxu0 0.0
    %329 = vmatpush1.msra.mxu0 0.0
    %330 = vmatprep.subr.mxu0 0.0
    %331 = vmatpush1.msra.mxu0 0.0
    %332 = vmatprep.subr.mxu0 0.0
    %333 = vmatpush1.msra.mxu0 0.0
    %334 = vmatprep.subr.mxu0 0.0
    %335 = vmatpush1.msra.mxu0 0.0
    %336 = vmatprep.subr.mxu0 0.0
    %337 = vmatpush1.msra.mxu0 0.0
    %338 = vmatprep.subr.mxu0 0.0
    %339 = vmatpush1.msra.mxu0 0.0
    %340 = vmatprep.subr.mxu0 0.0
    %341 = vmatpush1.msra.mxu0 0.0
    %342 = vmatprep.subr.mxu0 0.0
    %343 = vmatpush1.msra.mxu0 0.0
    %344 = vmatprep.subr.mxu0 0.0
    %345 = vmatpush1.msra.mxu0 0.0
    %346 = vmatprep.subr.mxu0 0.0
    %347 = vmatpush1.msra.mxu0 0.0
    %348 = vmatprep.subr.mxu0 0.0
    %349 = vmatpush1.msra.mxu0 0.0
    %350 = vmatprep.subr.mxu0 0.0
    %351 = vmatpush1.msra.mxu0 0.0
    %352 = vmatprep.subr.mxu0 0.0
    %353 = vmatpush1.msra.mxu0 0.0
    %354 = vmatprep.subr.mxu0 0.0
    %355 = vmatpush1.msra.mxu0 0.0
    %356 = vmatprep.subr.mxu0 0.0
    %357 = vmatpush1.msra.mxu0 0.0
    %358 = vmatprep.subr.mxu0 0.0
    %359 = vmatpush1.msra.mxu0 0.0
    %360 = vmatprep.mubr.f32.mxu0 0.0
    %361 = vmatmul.mubr.f32.gmra.mrb[0].mxu0 %v272
    %v362 = vpop.f32.mrb[0].mxu0
    %v363 = vadd.f32 %v294, %v362
    %v364 = vpop.f32.mrb[0].mxu0
    %365 = vdwg.mxu0
    %366 = vst [vmem:[#allocation10] sm:$0xff] %v363
    // Predicated region
    $region46: #{tpu_custom_call.1} parent=1 // pred_check
      _
    $region47: #{tpu_custom_call.1} parent=1 // pred_check_branch
      %368 = sbr.rel (0) target = $region49
    $region48: #{tpu_custom_call.1} parent=1 // pred_region
      %s370 = ssub.s32 128, 128
      %371 = vsyncadd [#allocation4], %s370
      %s373 = sshll.u32 [#allocation10], 4
      %s374 = int_to_ptr.vmem [resolvable:$true] %s373
      %376 = dma.vmem_to_hbm [thread:$0]  %s374, 128, %s7, [#allocation4]
    $region49: #{tpu_custom_call.1} parent=1 // pred_fallthru
      _
    // Predicated region
    $region50: #{tpu_custom_call.1} parent=1 // pred_check
      _
    $region51: #{tpu_custom_call.1} parent=1 // pred_check_branch
      %378 = sbr.rel (0) target = $region53
    $region52: #{tpu_custom_call.1} parent=1 // pred_region
      %379 = dma.done [#allocation4], 128
    $region53: #{tpu_custom_call.1} parent=1 // pred_fallthru
      _
    %380 = vsyncpa [#allocation3], 1
    %381 = vsyncpa [#allocation6], 1
    %382 = vsyncpa [#allocation9], 1
    %383 = vsyncpa [#allocation4], 1

</llo_original>
